<compile_context>
chip_gen: v7x
topology: tpu7x:2x2x1
jax: 0.10.0
libtpu: 0.0.40
codegen_flags: <defaults>
</compile_context>

<pallas_src>
import random
import numpy as np
import jax
import jax.numpy as jnp
from jax.experimental import pallas as pl
from jax.experimental.pallas import tpu as pltpu


def _round_up(x, m):
    return ((x + m - 1) // m) * m


def _vmem_capacity_bytes():
    cap = 64 * 1024 * 1024          # conservative fallback = v7x physical VMEM
    try:
        info = pltpu.get_tpu_info()
        cap = int(getattr(info, "vmem_capacity_bytes", cap))
    except Exception:
        pass
    return cap


def _tile_footprint_bytes(tm, tk, dp):
    # Double-buffered int8 mask + bf16 emb + f32 resident out + f32 rcnt.
    return (2 * tm * tk * 1
            + 2 * tk * dp * 2
            + 2 * tm * dp * 4
            + 2 * tm * 4)


def _choose_tiles(B, U, D, tm_target=512, tk_target=2048):
    # Lane-dense output.  Don't over-pad tiny D; only round to 256-wide N
    # tiles (v6e/v7x MXU width) when D is already > 128.
    lane_mult = 256 if D > 128 else 128
    Dp = _round_up(max(D, 128), lane_mult)

    # tm multiple of 32 (int8 sublane tiling), tk multiple of 128.
    B_al = _round_up(B, 32)
    U_al = _round_up(U, 128)

    tm = min(tm_target, B_al)
    if tm == B_al and B_al >= 64:
        # Keep >= 2 batch tiles so both v7x TensorCores get work.
        tm = _round_up((B_al + 1) // 2, 32)

    tk = min(tk_target, U_al)

    # Clip tiles against this chip's VMEM (prefer shrinking tk first).
    budget = max(16 << 20, int(_vmem_capacity_bytes() * 0.6))
    while _tile_footprint_bytes(tm, tk, Dp) > budget and tk > 128:
        tk = max(128, _round_up(tk // 2, 128))
    while _tile_footprint_bytes(tm, tk, Dp) > budget and tm > 32:
        tm = max(32, _round_up(tm // 2, 32))

    Bp = _round_up(B_al, tm)
    Up = _round_up(U_al, tk)
    return tm, tk, Bp, Up, Dp


def _mean_agg_kernel(mask_ref, emb_ref, rcnt_ref, out_ref):
    # mask_ref: (TM, TK) int8 0/1     emb_ref: (TK, Dp) bf16
    # rcnt_ref: (TM, 1)  f32 (1/num_neigh, 0 for empty / padded rows)
    # out_ref : (TM, Dp) f32 -- block index constant along k => resident
    #                            accumulator (no extra scratch needed).
    k = pl.program_id(1)

    @pl.when(k == 0)
    def _():
        out_ref[...] = jnp.zeros_like(out_ref)

    m = mask_ref[...].astype(jnp.bfloat16)          # int8 0/1 -> bf16, exact
    out_ref[...] += jnp.dot(m, emb_ref[...],
                            preferred_element_type=jnp.float32)

    @pl.when(k == pl.num_programs(1) - 1)
    def _():
        # Mean normalization after the matmul: per-row scale by 1/count.
        out_ref[...] = out_ref[...] * rcnt_ref[...]


def _pallas_mean_aggregate(mask_i8, emb_bf16, rcnt_f32, *, tm, tk):
    Bp, Up = mask_i8.shape
    Up2, Dp = emb_bf16.shape
    assert Up == Up2 and Bp % tm == 0 and Up % tk == 0

    n_bt, n_kt = Bp // tm, Up // tk
    # Embedding is fetched once when a single tk block covers it (block index
    # constant -> resident); otherwise the slab is re-streamed per batch tile.
    emb_bytes = Up * Dp * 2 * (n_bt if n_kt > 1 else 1)
    ce = pl.CostEstimate(
        flops=2 * Bp * Up * Dp,
        transcendentals=0,
        bytes_accessed=Bp * Up * 1 + emb_bytes + Bp * 4 + Bp * Dp * 4,
    )

    footprint = _tile_footprint_bytes(tm, tk, Dp)
    vmem_limit = int(min(_vmem_capacity_bytes(),
                         max(32 << 20, footprint + (8 << 20))))

    return pl.pallas_call(
        _mean_agg_kernel,
        out_shape=jax.ShapeDtypeStruct((Bp, Dp), jnp.float32),
        grid=(n_bt, n_kt),
        in_specs=[
            pl.BlockSpec((tm, tk), lambda i, k: (i, k)),    # int8 mask tile
            pl.BlockSpec((tk, Dp), lambda i, k: (k, 0)),    # bf16 emb tile
            pl.BlockSpec((tm, 1), lambda i, k: (i, 0)),     # 1/count per row
        ],
        out_specs=pl.BlockSpec((tm, Dp), lambda i, k: (i, 0)),
        compiler_params=pltpu.CompilerParams(
            dimension_semantics=("parallel", "arbitrary"),
            vmem_limit_bytes=vmem_limit),
        cost_estimate=ce,
    )(mask_i8, emb_bf16, rcnt_f32)


def _sample_and_index(nodes, to_neighs, num_sample, gcn):
    """Host-side preprocessing identical to the PyTorch module (glue)."""
    _set = set
    if num_sample is not None:
        _sample = random.sample
        samp_neighs = [
            _set(_sample(sorted(to_neigh), num_sample))
            if len(to_neigh) >= num_sample else to_neigh
            for to_neigh in to_neighs
        ]
    else:
        samp_neighs = to_neighs
    if gcn:
        samp_neighs = [samp_neigh | {nodes[i]} for i, samp_neigh in enumerate(samp_neighs)]
    unique_nodes_list = list(set.union(*samp_neighs))
    unique_nodes = {n: i for i, n in enumerate(unique_nodes_list)}
    return samp_neighs, unique_nodes_list, unique_nodes


def mean_aggregator_forward(nodes, to_neighs, feature_table, num_sample=10, gcn=True,
                            tm_target=512, tk_target=2048):
    """Reproduces MeanAggregator.forward.

    nodes         : list[int]           -- batch of node ids
    to_neighs     : list[set[int]]      -- neighbor sets per node
    feature_table : jnp.ndarray [N, D]  -- plays the role of `self.features`
    """
    # TODO(synk): neighbor sampling / set union / index dicts are inherently
    # host-side Python; a scalar-prefetch gather kernel (per-row neighbor index
    # lists in SMEM) would avoid the dense BxU mask entirely for very large U.
    samp_neighs, unique_nodes_list, unique_nodes = _sample_and_index(
        nodes, to_neighs, num_sample, gcn)

    B = len(samp_neighs)
    U = len(unique_nodes_list)
    D = feature_table.shape[1]

    tm, tk, Bp, Up, Dp = _choose_tiles(B, U, D, tm_target, tk_target)

    # --- Edge index lists (small: ~B * num_sample entries) -> device scatter,
    #     so only the indices cross PCIe, not the dense mask. ----------------
    col = np.array([unique_nodes[n] for s in samp_neighs for n in s], dtype=np.int32)
    row = np.array([i for i in range(B) for _ in range(len(samp_neighs[i]))], dtype=np.int32)
    mask = jnp.zeros((Bp, Up), dtype=jnp.int8).at[
        jnp.asarray(row), jnp.asarray(col)].set(1)

    # --- Per-row 1/num_neigh (0 for empty / padded rows), computed on host ---
    counts = np.array([len(s) for s in samp_neighs], dtype=np.float32)
    rcnt = np.zeros((Bp, 1), dtype=np.float32)
    rcnt[:B, 0] = np.where(counts > 0, 1.0 / np.maximum(counts, 1.0), 0.0)

    # --- features(LongTensor(unique_nodes_list)) -> embedding lookup (glue) ---
    idx = jnp.asarray(unique_nodes_list, dtype=jnp.int32)
    embed = feature_table[idx].astype(jnp.bfloat16)
    emb_pad = jnp.pad(embed, ((0, Up - U), (0, Dp - D)))

    out_pad = _pallas_mean_aggregate(mask, emb_pad, jnp.asarray(rcnt), tm=tm, tk=tk)
    return out_pad[:B, :D]


if __name__ == "__main__":
    random.seed(0)
    key = jax.random.PRNGKey(0)

    # Synthetic graph + feature table (small, deterministic).
    num_graph_nodes = 40
    feat_dim = 32
    batch = 8
    num_sample = 5

    feature_table = jax.random.normal(key, (num_graph_nodes, feat_dim), dtype=jnp.float32)

    # Deterministic random adjacency (sets of neighbors per node).
    adj = []
    for n in range(num_graph_nodes):
        deg = random.randint(2, 8)
        neighs = set(random.sample(range(num_graph_nodes), deg))
        neighs.discard(n)
        if not neighs:
            neighs = {(n + 1) % num_graph_nodes}
        adj.append(neighs)

    nodes = list(range(batch))
    to_neighs = [adj[n] for n in nodes]

    # Run the kernel (re-seed so the reference below sees the same sampling).
    random.seed(1)
    out = mean_aggregator_forward(nodes, to_neighs, feature_table,
                                  num_sample=num_sample, gcn=True)
    out = jax.block_until_ready(out)

    # Pure NumPy reference of the same math (same random sampling).
    random.seed(1)
    samp_neighs, unique_list, unique_map = _sample_and_index(
        nodes, to_neighs, num_sample, gcn=True)
    Bref, Uref = len(samp_neighs), len(unique_list)
    mask_ref = np.zeros((Bref, Uref), dtype=np.float32)
    for i, s in enumerate(samp_neighs):
        for n in s:
            mask_ref[i, unique_map[n]] = 1.0
    cnt = mask_ref.sum(1, keepdims=True)
    norm = np.where(cnt > 0, mask_ref / np.maximum(cnt, 1.0), 0.0)
    emb_ref = np.asarray(feature_table)[np.asarray(unique_list, dtype=np.int64)]
    emb_ref_bf16 = np.asarray(emb_ref, dtype=jnp.bfloat16).astype(np.float32)
    ref = norm @ emb_ref_bf16

    assert out.shape == (batch, feat_dim)
    assert bool(jnp.all(jnp.isfinite(out)))
    np.testing.assert_allclose(np.asarray(out), ref, rtol=1e-2, atol=1e-2)
    print("KERNEL_OK")
</pallas_src>

<mosaic_0001>
module attributes {stable_mosaic.version = 11 : i64} {
  func.func @_mean_agg_kernel(%arg0: i32, %arg1: i32, %arg2: memref<32x128xi8, #tpu.memory_space<vmem>>, %arg3: memref<128x128xbf16, #tpu.memory_space<vmem>>, %arg4: memref<32x1xf32, #tpu.memory_space<vmem>>, %arg5: memref<32x128xf32, #tpu.memory_space<vmem>>) attributes {dimension_semantics = [#tpu.dimension_semantics<parallel>, #tpu.dimension_semantics<arbitrary>], iteration_bounds = array<i64: 1, 1>, scalar_prefetch = 0 : i64, scratch_operands = 0 : i64, tpu.core_type = #tpu.core_type<tc>, window_params = [{transform_indices = @transform_0, window_bounds = array<i64: 32, 128>}, {transform_indices = @transform_1, window_bounds = array<i64: 128, 128>}, {transform_indices = @transform_2, window_bounds = array<i64: 32, 1>}, {transform_indices = @transform_3, window_bounds = array<i64: 32, 128>}]} {
    %c0_i32 = arith.constant 0 : i32
    %0 = arith.cmpi eq, %arg1, %c0_i32 : i32
    %1 = arith.extui %0 : i1 to i32
    %c0_i32_0 = arith.constant 0 : i32
    %2 = arith.cmpi ne, %1, %c0_i32_0 : i32
    scf.if %2 {
      %cst_10 = arith.constant 0.000000e+00 : f32
      %13 = vector.broadcast %cst_10 : f32 to vector<32x128xf32>
      %c0_11 = arith.constant 0 : index
      %c0_12 = arith.constant 0 : index
      %14 = vector.load %arg5[%c0_11, %c0_12] : memref<32x128xf32, #tpu.memory_space<vmem>>, vector<32x128xf32>
      tpu.vector_store %arg5[%c0_11, %c0_12], %13 {strides = array<i32>} : memref<32x128xf32, #tpu.memory_space<vmem>>, vector<32x128xf32>,
    } else {
    }
    %c0 = arith.constant 0 : index
    %c0_1 = arith.constant 0 : index
    %3 = vector.load %arg2[%c0, %c0_1] : memref<32x128xi8, #tpu.memory_space<vmem>>, vector<32x128xi8>
    %4 = arith.sitofp %3 : vector<32x128xi8> to vector<32x128xbf16>
    %c0_2 = arith.constant 0 : index
    %c0_3 = arith.constant 0 : index
    %5 = vector.load %arg5[%c0_2, %c0_3] : memref<32x128xf32, #tpu.memory_space<vmem>>, vector<32x128xf32>
    %c0_4 = arith.constant 0 : index
    %c0_5 = arith.constant 0 : index
    %6 = vector.load %arg3[%c0_4, %c0_5] : memref<128x128xbf16, #tpu.memory_space<vmem>>, vector<128x128xbf16>
    %cst = arith.constant dense<0.000000e+00> : vector<32x128xf32>
    %7 = tpu.matmul %4, %6, %cst {dimension_numbers = #tpu.dot_dimension_numbers<[1], [0], [0], [1], [0, 0, 1, 1], [], []>} : vector<32x128xbf16>, vector<128x128xbf16>, vector<32x128xf32> -> vector<32x128xf32>
    %8 = arith.addf %5, %7 : vector<32x128xf32>
    %c0_6 = arith.constant 0 : index
    %c0_7 = arith.constant 0 : index
    %9 = vector.load %arg5[%c0_6, %c0_7] : memref<32x128xf32, #tpu.memory_space<vmem>>, vector<32x128xf32>
    tpu.vector_store %arg5[%c0_6, %c0_7], %8 {strides = array<i32>} : memref<32x128xf32, #tpu.memory_space<vmem>>, vector<32x128xf32>,
    %c0_i32_8 = arith.constant 0 : i32
    %10 = arith.cmpi eq, %arg1, %c0_i32_8 : i32
    %11 = arith.extui %10 : i1 to i32
    %c0_i32_9 = arith.constant 0 : i32
    %12 = arith.cmpi ne, %11, %c0_i32_9 : i32
    scf.if %12 {
      %c0_10 = arith.constant 0 : index
      %c0_11 = arith.constant 0 : index
      %13 = vector.load %arg5[%c0_10, %c0_11] : memref<32x128xf32, #tpu.memory_space<vmem>>, vector<32x128xf32>
      %c0_12 = arith.constant 0 : index
      %c0_13 = arith.constant 0 : index
      %14 = vector.load %arg4[%c0_12, %c0_13] : memref<32x1xf32, #tpu.memory_space<vmem>>, vector<32x1xf32>
      %15 = vector.broadcast %14 : vector<32x1xf32> to vector<32x128xf32>
      %16 = arith.mulf %13, %15 : vector<32x128xf32>
      %c0_14 = arith.constant 0 : index
      %c0_15 = arith.constant 0 : index
      %17 = vector.load %arg5[%c0_14, %c0_15] : memref<32x128xf32, #tpu.memory_space<vmem>>, vector<32x128xf32>
      tpu.vector_store %arg5[%c0_14, %c0_15], %16 {strides = array<i32>} : memref<32x128xf32, #tpu.memory_space<vmem>>, vector<32x128xf32>,
    } else {
    }
    return
  }
  func.func @transform_0(%arg0: i32, %arg1: i32) -> (i32, i32) {
    %c0_i32 = arith.constant 0 : i32
    return %arg0, %arg1 : i32, i32
  }
  func.func @transform_1(%arg0: i32, %arg1: i32) -> (i32, i32) {
    %c0_i32 = arith.constant 0 : i32
    %c0_i32_0 = arith.constant 0 : i32
    return %arg1, %c0_i32 : i32, i32
  }
  func.func @transform_2(%arg0: i32, %arg1: i32) -> (i32, i32) {
    %c0_i32 = arith.constant 0 : i32
    %c0_i32_0 = arith.constant 0 : i32
    return %arg0, %c0_i32 : i32, i32
  }
  func.func @transform_3(%arg0: i32, %arg1: i32) -> (i32, i32) {
    %c0_i32 = arith.constant 0 : i32
    %c0_i32_0 = arith.constant 0 : i32
    return %arg0, %c0_i32 : i32, i32
  }
}

</mosaic_0001>

<llo_original>
// kernel: tpu_custom_call.1
$region0: #{tpu_custom_call.1}
  #allocation0 [shape = 'u32[]', space=smem, size = 0x4, offset = 0x4, fixed_abs, tag = 'smem constant byte address 0x4 - core index']
  #allocation1 [shape = 'u32[144,128]{1,0:T(1,128)}', space=vmem, size = 0x12000, scoped, tag = 'internal scratch']
  %s0 = inlined_call_operand.vmem [shape: s8[32,128], index: 0, kind: input, shape index: {}]
  %s1 = inlined_call_operand.hbm [shape: bf16[128,128], index: 1, kind: input, shape index: {}]
  %s2 = inlined_call_operand.vmem [shape: f32[32,1], index: 2, kind: input, shape index: {}]
  %s3 = inlined_call_operand.hbm [shape: f32[32,128], index: 3, kind: output, shape index: {}]
  %s4 = sld [smem:[#allocation0]]
  $region34: #{tpu_custom_call.1} parent=0
    _
  %s6 = ssub.s32 1, %s4
  %s7 = scalar_select 0, %s6, %s4
  $region1: #{tpu_custom_call.1} parent=0
    #allocation2 [shape = 'u8[32768]{0}', space=vmem, size = 0x8000, scoped, tag = 'input window, operand 1, single buffered']
    #allocation3 [shape = 's32[1]{0}', space=sflag, size = 0x4, scoped, tag = 'scoped memory for tpu_custom_call.1']
    #allocation4 [shape = 's32[1]{0}', space=sflag, size = 0x4, scoped, tag = 'scoped memory for tpu_custom_call.1']
    #allocation5 [shape = 'u8[16384]{0}', space=vmem, size = 0x4000, scoped, tag = 'output window, operand 0, single buffered']
    %8 = vsyncpa [#allocation3], 0
    %9 = vsyncpa [#allocation4], 0
    // Predicated region
    $region2: #{tpu_custom_call.1} parent=1 // pred_check
      _
    $region3: #{tpu_custom_call.1} parent=1 // pred_check_branch
      %11 = sbr.rel (0) target = $region5
    $region4: #{tpu_custom_call.1} parent=1 // pred_region
      _
    $region5: #{tpu_custom_call.1} parent=1 // pred_fallthru
      _
    // Predicated region
    $region6: #{tpu_custom_call.1} parent=1 // pred_check
      _
    $region7: #{tpu_custom_call.1} parent=1 // pred_check_branch
      %13 = sbr.rel (0) target = $region9
    $region8: #{tpu_custom_call.1} parent=1 // pred_region
      %s15 = ssub.s32 1024, 1024
      %16 = vsyncadd [#allocation3], %s15
      %s17 = sshll.u32 [#allocation2], 4
      %s18 = int_to_ptr.vmem [resolvable:$true] %s17
      %23 = dma.hbm_to_vmem [thread:$0]  %s1, 1024, %s18, [#allocation3], 64, 64, 4
    $region9: #{tpu_custom_call.1} parent=1 // pred_fallthru
      _
    // Predicated region
    $region10: #{tpu_custom_call.1} parent=1 // pred_check
      _
    $region11: #{tpu_custom_call.1} parent=1 // pred_check_branch
      %25 = sbr.rel (0) target = $region13
    $region12: #{tpu_custom_call.1} parent=1 // pred_region
      _
    $region13: #{tpu_custom_call.1} parent=1 // pred_fallthru
      _
    // Predicated region
    $region14: #{tpu_custom_call.1} parent=1 // pred_check
      _
    $region15: #{tpu_custom_call.1} parent=1 // pred_check_branch
      %27 = sbr.rel (0) target = $region17
    $region16: #{tpu_custom_call.1} parent=1 // pred_region
      %28 = dma.done [#allocation3], 1024
    $region17: #{tpu_custom_call.1} parent=1 // pred_fallthru
      _
    %p30 = scmp.eq.s32.totalorder 0, 0
    // Predicated region
    $region18: #{tpu_custom_call.1} parent=1 // pred_check
      %p31 = pneg %p30
    $region19: #{tpu_custom_call.1} parent=1 // pred_check_branch
      %33 = sbr.rel (%p31) target = $region21
    $region20: #{tpu_custom_call.1} parent=1 // pred_region
      %34 = vst [vmem:[#allocation5] sm:$0xff] 0.0
      %35 = vst [vmem:[#allocation5 + $0x8] sm:$0xff] 0.0
      %36 = vst [vmem:[#allocation5 + $0x10] sm:$0xff] 0.0
      %37 = vst [vmem:[#allocation5 + $0x18] sm:$0xff] 0.0
    $region21: #{tpu_custom_call.1} parent=1 // pred_fallthru
      _
    %v38 = vld [vmem:[%s0] sm:$0xff]
    %v39 = vunpack.c.l.s8.bf16 %v38
    %v40 = vunpack.c.h.s8.bf16 %v38
    %v41 = vld [vmem:[#allocation5] sm:$0xff]
    %v42 = vld [vmem:[#allocation5 + $0x8] sm:$0xff]
    %v43 = vld [vmem:[#allocation5 + $0x10] sm:$0xff]
    %v44 = vld [vmem:[#allocation5 + $0x18] sm:$0xff]
    %v45 = vld [vmem:[#allocation2] sm:$0xf]
    %v46 = vld [vmem:[#allocation2 + $0x4] sm:$0xf]
    %v47 = vld [vmem:[#allocation2 + $0x8] sm:$0xf]
    %v48 = vld [vmem:[#allocation2 + $0xc] sm:$0xf]
    %v49 = vld [vmem:[#allocation2 + $0x10] sm:$0xf]
    %v50 = vld [vmem:[#allocation2 + $0x14] sm:$0xf]
    %v51 = vld [vmem:[#allocation2 + $0x18] sm:$0xf]
    %v52 = vld [vmem:[#allocation2 + $0x1c] sm:$0xf]
    %v53 = vld [vmem:[#allocation2 + $0x20] sm:$0xf]
    %v54 = vld [vmem:[#allocation2 + $0x24] sm:$0xf]
    %v55 = vld [vmem:[#allocation2 + $0x28] sm:$0xf]
    %v56 = vld [vmem:[#allocation2 + $0x2c] sm:$0xf]
    %v57 = vld [vmem:[#allocation2 + $0x30] sm:$0xf]
    %v58 = vld [vmem:[#allocation2 + $0x34] sm:$0xf]
    %v59 = vld [vmem:[#allocation2 + $0x38] sm:$0xf]
    %v60 = vld [vmem:[#allocation2 + $0x3c] sm:$0xf]
    %v77 = vunpack.c.l.b16 %v45
    %v78 = vunpack.c.l.b16 %v46
    %v79 = vunpack.c.l.b16 %v47
    %v80 = vunpack.c.l.b16 %v48
    %v81 = vunpack.c.l.b16 %v49
    %v82 = vunpack.c.l.b16 %v50
    %v83 = vunpack.c.l.b16 %v51
    %v84 = vunpack.c.l.b16 %v52
    %v85 = vunpack.c.l.b16 %v53
    %v86 = vunpack.c.l.b16 %v54
    %v87 = vunpack.c.l.b16 %v55
    %v88 = vunpack.c.l.b16 %v56
    %v89 = vunpack.c.l.b16 %v57
    %v90 = vunpack.c.l.b16 %v58
    %v91 = vunpack.c.l.b16 %v59
    %v92 = vunpack.c.l.b16 %v60
    %v93 = vpack.c.b16 %v78, %v77
    %v94 = vpack.c.b16 %v80, %v79
    %v95 = vpack.c.b16 %v82, %v81
    %v96 = vpack.c.b16 %v84, %v83
    %v97 = vpack.c.b16 %v86, %v85
    %v98 = vpack.c.b16 %v88, %v87
    %v99 = vpack.c.b16 %v90, %v89
    %v100 = vpack.c.b16 %v92, %v91
    %109 = vmatprep.subr.bf16.mxu0 0
    %110 = vmatpush1.bf16.msra.mxu0 %v93
    %111 = vmatprep.subr.bf16.mxu0 0
    %112 = vmatpush1.bf16.msra.mxu0 %v94
    %113 = vmatprep.subr.bf16.mxu0 0
    %114 = vmatpush1.bf16.msra.mxu0 %v95
    %115 = vmatprep.subr.bf16.mxu0 0
    %116 = vmatpush1.bf16.msra.mxu0 %v96
    %117 = vmatprep.subr.bf16.mxu0 0
    %118 = vmatpush1.bf16.msra.mxu0 %v97
    %119 = vmatprep.subr.bf16.mxu0 0
    %120 = vmatpush1.bf16.msra.mxu0 %v98
    %121 = vmatprep.subr.bf16.mxu0 0
    %122 = vmatpush1.bf16.msra.mxu0 %v99
    %123 = vmatprep.subr.bf16.mxu0 0
    %124 = vmatpush1.bf16.msra.mxu0 %v100
    %125 = vmatprep.subr.bf16.mxu0 0
    %126 = vmatpush1.bf16.msra.mxu0 0
    %127 = vmatprep.subr.bf16.mxu0 0
    %128 = vmatpush1.bf16.msra.mxu0 0
    %129 = vmatprep.subr.bf16.mxu0 0
    %130 = vmatpush1.bf16.msra.mxu0 0
    %131 = vmatprep.subr.bf16.mxu0 0
    %132 = vmatpush1.bf16.msra.mxu0 0
    %133 = vmatprep.subr.bf16.mxu0 0
    %134 = vmatpush1.bf16.msra.mxu0 0
    %135 = vmatprep.subr.bf16.mxu0 0
    %136 = vmatpush1.bf16.msra.mxu0 0
    %137 = vmatprep.subr.bf16.mxu0 0
    %138 = vmatpush1.bf16.msra.mxu0 0
    %139 = vmatprep.subr.bf16.mxu0 0
    %140 = vmatpush1.bf16.msra.mxu0 0
    %141 = vmatprep.mubr.bf16.mxu0 0
    %142 = vmatmul.mubr.bf16.gmra.mrb[0].mxu0 %v39
    %v143 = vpop.f32.mrb[0].mxu0
    %v144 = vadd.f32 0.0, %v143
    %v145 = vpop.f32.mrb[0].mxu0
    %v146 = vpop.f32.mrb[0].mxu0
    %v147 = vadd.f32 0.0, %v146
    %v148 = vpop.f32.mrb[0].mxu0
    %149 = vmatprep.mubr.bf16.mxu0 0
    %150 = vmatmul.mubr.bf16.gmra.mrb[0].mxu0 %v40
    %v151 = vpop.f32.mrb[0].mxu0
    %v152 = vadd.f32 0.0, %v151
    %v153 = vpop.f32.mrb[0].mxu0
    %v154 = vpop.f32.mrb[0].mxu0
    %v155 = vadd.f32 0.0, %v154
    %v156 = vpop.f32.mrb[0].mxu0
    %157 = vdwg.mxu0
    %v158 = vadd.f32 %v41, %v144
    %v159 = vadd.f32 %v42, %v147
    %v160 = vadd.f32 %v43, %v152
    %v161 = vadd.f32 %v44, %v155
    %162 = vst [vmem:[#allocation5] sm:$0xff] %v158
    %163 = vst [vmem:[#allocation5 + $0x8] sm:$0xff] %v159
    %164 = vst [vmem:[#allocation5 + $0x10] sm:$0xff] %v160
    %165 = vst [vmem:[#allocation5 + $0x18] sm:$0xff] %v161
    // Predicated region
    $region22: #{tpu_custom_call.1} parent=1 // pred_check
      %p166 = pneg %p30
    $region23: #{tpu_custom_call.1} parent=1 // pred_check_branch
      %168 = sbr.rel (%p166) target = $region25
    $region24: #{tpu_custom_call.1} parent=1 // pred_region
      %v169 = vld [vmem:[#allocation5] sm:$0xff]
      %v170 = vld [vmem:[#allocation5 + $0x8] sm:$0xff]
      %v171 = vld [vmem:[#allocation5 + $0x10] sm:$0xff]
      %v172 = vld [vmem:[#allocation5 + $0x18] sm:$0xff]
      %v173 = vld [vmem:[%s2] sm:$0xff]
      %v174 = vld [vmem:[%s2 + $0x8] sm:$0xff]
      %v175 = vld [vmem:[%s2 + $0x10] sm:$0xff]
      %v176 = vld [vmem:[%s2 + $0x18] sm:$0xff]
      %178 = vset.pattern.permute.xlu0 0
      %179 = vperm.xlu0 %178, %v173
      %v180 = vpop.permute.xlu0 %179
      %183 = vset.pattern.permute.xlu0 0
      %184 = vperm.xlu0 %183, %v174
      %v185 = vpop.permute.xlu0 %184
      %188 = vset.pattern.permute.xlu0 0
      %189 = vperm.xlu0 %188, %v175
      %v190 = vpop.permute.xlu0 %189
      %193 = vset.pattern.permute.xlu0 0
      %194 = vperm.xlu0 %193, %v176
      %v195 = vpop.permute.xlu0 %194
      %v197 = vmul.f32 %v169, %v180
      %v198 = vmul.f32 %v170, %v185
      %v199 = vmul.f32 %v171, %v190
      %v200 = vmul.f32 %v172, %v195
      %201 = vst [vmem:[#allocation5] sm:$0xff] %v197
      %202 = vst [vmem:[#allocation5 + $0x8] sm:$0xff] %v198
      %203 = vst [vmem:[#allocation5 + $0x10] sm:$0xff] %v199
      %204 = vst [vmem:[#allocation5 + $0x18] sm:$0xff] %v200
    $region25: #{tpu_custom_call.1} parent=1 // pred_fallthru
      _
    // Predicated region
    $region26: #{tpu_custom_call.1} parent=1 // pred_check
      _
    $region27: #{tpu_custom_call.1} parent=1 // pred_check_branch
      %206 = sbr.rel (0) target = $region29
    $region28: #{tpu_custom_call.1} parent=1 // pred_region
      %s208 = ssub.s32 512, 512
      %209 = vsyncadd [#allocation4], %s208
      %s210 = sshll.u32 [#allocation5], 4
      %s211 = int_to_ptr.vmem [resolvable:$true] %s210
      %216 = dma.vmem_to_hbm [thread:$0]  %s211, 512, %s3, [#allocation4], 128, 128, 8
    $region29: #{tpu_custom_call.1} parent=1 // pred_fallthru
      _
    // Predicated region
    $region30: #{tpu_custom_call.1} parent=1 // pred_check
      _
    $region31: #{tpu_custom_call.1} parent=1 // pred_check_branch
      %218 = sbr.rel (0) target = $region33
    $region32: #{tpu_custom_call.1} parent=1 // pred_region
      %219 = dma.done [#allocation4], 512
    $region33: #{tpu_custom_call.1} parent=1 // pred_fallthru
      _
    %220 = vsyncpa [#allocation3], 1
    %221 = vsyncpa [#allocation4], 1

</llo_original>
